<compile_context>
chip_gen: v5e
topology: v5e:2x2
jax: 0.10.0
libtpu: 0.0.40
codegen_flags: <defaults>
</compile_context>

<pallas_src>
import math
from functools import partial

import jax
import jax.numpy as jnp
from jax import lax
from jax.experimental import pallas as pl
from jax.experimental.pallas import tpu as pltpu

B = 8            # batch
D = 32           # latent_dim
DH = D // 2      # half latent dim (coupling split)
H = 32           # hidden width of coupling nets
NB = 4           # num_blocks
LOG_2PI = math.log(2.0 * math.pi)

# packed-parameter slab layout (one block per leading index)
SLAB_ROWS = 88               # 16 (w1) + 64 (w2) + 1 (bias) padded to sublane x8
SLAB_LANES = 128             # lane-padded
BIAS_ROW = DH + 2 * H        # = 80

# merged-output lane layout
OUT_LANES = 128
LANE_LDJ = 2 * D             # 64
LANE_NLL = 2 * D + 1         # 65
LANE_LOSS = 2 * D + 2        # 66
PAD_LANES = OUT_LANES - (2 * D + 3)


def _realnvp_fwd_kernel(xin_ref, slab_ref, out_ref):
    xin = xin_ref[...]                       # [B, 2D] = [x | noise]
    xn = xin[:, :D] + xin[:, D:]             # dequantized input (fused add)
    xa0 = xn[:, :DH]
    xb0 = xn[:, DH:]

    # lane mask for the fused layer-1 activation (tanh half | relu half);
    # hoisted out of the loop (JAX does not CSE broadcasts).
    col = lax.broadcasted_iota(jnp.int32, (B, 2 * H), 1)
    s_half = col < H

    def block(i, carry):
        xa, xb, s_acc = carry
        # weight loads live inside the iteration (bounded live ranges)
        w1 = slab_ref[i, pl.ds(0, DH), pl.ds(0, 2 * H)]             # [DH, 2H]
        b1 = slab_ref[i, pl.ds(BIAS_ROW, 1), pl.ds(0, 2 * H)]       # [1, 2H]

        # fused first layers of s-net and t-net: one matmul, lane-split act
        z1 = jnp.dot(xa, w1, preferred_element_type=jnp.float32) + b1
        h = jnp.where(s_half, jnp.tanh(z1), jnp.maximum(z1, 0.0))

        w2 = slab_ref[i, pl.ds(DH, 2 * H), pl.ds(0, 2 * DH)]        # [2H, 2DH]
        b2 = slab_ref[i, pl.ds(BIAS_ROW, 1), pl.ds(2 * H, 2 * DH)]  # [1, 2DH]

        # fused second layers (block-diagonal weight): [s | t] in one matmul
        z2 = jnp.dot(h, w2, preferred_element_type=jnp.float32) + b2
        s = jnp.tanh(z2[:, :DH])
        t = z2[:, DH:]

        # affine coupling; the flip(dim=1) permutation is baked into the
        # packed weights, so the "permute" is just the carry swap below.
        yb = (xb - t) * jnp.exp(-s)
        return yb, xa, s_acc + s             # sum(s) is permutation-invariant

    xa, xb, s_acc = lax.fori_loop(
        0, NB, block,
        (xa0, xb0, jnp.zeros((B, DH), jnp.float32)),
        unroll=True)

    ldj = -jnp.sum(s_acc, axis=1, keepdims=True)                     # [B, 1]
    xf = jnp.concatenate([xa, xb], axis=1)                           # [B, D]
    # per-row -(prior.log_prob(xf) + ldj), standard-normal prior
    nll = 0.5 * jnp.sum(xf * xf, axis=1, keepdims=True) + 0.5 * D * LOG_2PI - ldj
    loss_col = jnp.zeros((B, 1), jnp.float32) + jnp.mean(nll)        # mean in-kernel
    pad = jnp.zeros((B, PAD_LANES), jnp.float32)

    # single lane-dense store (one unmasked vst group) instead of two outputs
    out_ref[...] = jnp.concatenate([xf, xn, ldj, nll, loss_col, pad], axis=1)


def init_params(key):
    """Deterministic PyTorch-Linear-style init (uniform +-1/sqrt(fan_in))."""
    def linear(k, fan_in, fan_out):
        kw, kb = jax.random.split(k)
        bound = 1.0 / math.sqrt(fan_in)
        w = jax.random.uniform(kw, (fan_in, fan_out), jnp.float32, -bound, bound)
        b = jax.random.uniform(kb, (1, fan_out), jnp.float32, -bound, bound)
        return w, b

    keys = jax.random.split(key, NB * 4)
    sw1, sb1, sw2, sb2, tw1, tb1, tw2, tb2 = ([] for _ in range(8))
    for i in range(NB):
        w, b = linear(keys[4 * i + 0], DH, H); sw1.append(w); sb1.append(b)
        w, b = linear(keys[4 * i + 1], H, DH); sw2.append(w); sb2.append(b)
        w, b = linear(keys[4 * i + 2], DH, H); tw1.append(w); tb1.append(b)
        w, b = linear(keys[4 * i + 3], H, DH); tw2.append(w); tb2.append(b)
    stack = lambda xs: jnp.stack(xs, axis=0)
    return tuple(map(stack, (sw1, sb1, sw2, sb2, tw1, tb1, tw2, tb2)))


def pack_params(params):
    """Fold the per-block flip into the weights, fuse s/t nets, and pack
    everything into a single [NB, SLAB_ROWS, SLAB_LANES] f32 slab.

    Frame tracking: at block i the kernel's stored xa/xb relate to the true
    ones by an optional feature reversal R, flags (p, q).  p folds into the
    layer-1 input rows, q into the layer-2 output columns + biases; sum(s) is
    unaffected.  Returns (slab, (p_final, q_final))."""
    sw1, sb1, sw2, sb2, tw1, tb1, tw2, tb2 = params
    zeros_h = jnp.zeros((H, DH), jnp.float32)
    slab = jnp.zeros((NB, SLAB_ROWS, SLAB_LANES), jnp.float32)
    p = q = 0
    for i in range(NB):
        a_s1 = jnp.flip(sw1[i], axis=0) if p else sw1[i]
        a_t1 = jnp.flip(tw1[i], axis=0) if p else tw1[i]
        w1 = jnp.concatenate([a_s1, a_t1], axis=1)                   # [DH, 2H]
        b1 = jnp.concatenate([sb1[i], tb1[i]], axis=1)               # [1, 2H]

        a_s2 = jnp.flip(sw2[i], axis=1) if q else sw2[i]
        a_t2 = jnp.flip(tw2[i], axis=1) if q else tw2[i]
        b_s2 = jnp.flip(sb2[i], axis=1) if q else sb2[i]
        b_t2 = jnp.flip(tb2[i], axis=1) if q else tb2[i]
        w2 = jnp.concatenate(
            [jnp.concatenate([a_s2, zeros_h], axis=1),
             jnp.concatenate([zeros_h, a_t2], axis=1)], axis=0)      # [2H, 2DH]
        b2 = jnp.concatenate([b_s2, b_t2], axis=1)                   # [1, 2DH]

        slab = slab.at[i, :DH, :2 * H].set(w1)
        slab = slab.at[i, DH:DH + 2 * H, :2 * DH].set(w2)
        slab = slab.at[i, BIAS_ROW, :2 * H].set(b1[0])
        slab = slab.at[i, BIAS_ROW, 2 * H:2 * H + 2 * DH].set(b2[0])

        p, q = (q + 1) % 2, (p + 1) % 2      # effect of the next block's flip
    return slab, (p, q)


@partial(jax.jit, static_argnames=("p_fin", "q_fin"))
def realnvp_forward(x, noise, slab, p_fin=0, q_fin=0):
    """Returns (loss, x_transformed, ldj, dequantized_input)."""
    xin = jnp.concatenate([x, noise], axis=1)                        # [B, 2D]

    out = pl.pallas_call(
        _realnvp_fwd_kernel,
        grid=(1,),
        in_specs=[
            pl.BlockSpec((B, 2 * D), lambda i: (0, 0)),
            pl.BlockSpec((NB, SLAB_ROWS, SLAB_LANES), lambda i: (0, 0, 0)),
        ],
        out_specs=pl.BlockSpec((B, OUT_LANES), lambda i: (0, 0)),
        out_shape=jax.ShapeDtypeStruct((B, OUT_LANES), jnp.float32),
        compiler_params=pltpu.CompilerParams(
            dimension_semantics=("arbitrary",)),
    )(xin, slab)

    xf = out[:, :D]
    # undo any pending half-reversal (static no-op for even num_blocks)
    if p_fin or q_fin:
        xa, xb = xf[:, :DH], xf[:, DH:]
        if p_fin:
            xa = jnp.flip(xa, axis=1)
        if q_fin:
            xb = jnp.flip(xb, axis=1)
        xf = jnp.concatenate([xa, xb], axis=1)

    xn = out[:, D:2 * D]
    ldj = out[:, LANE_LDJ]
    loss = out[0, LANE_LOSS]
    return loss, xf, ldj, xn


def realnvp_reference(xn, params):
    """Pure-JAX reference mirroring the PyTorch module's _f / forward."""
    sw1, sb1, sw2, sb2, tw1, tb1, tw2, tb2 = params
    x = xn
    ldj = jnp.zeros((x.shape[0],), jnp.float32)
    for i in range(NB):
        xa, xb = x[:, :DH], x[:, DH:]
        hs = jnp.tanh(xa @ sw1[i] + sb1[i, 0])
        s = jnp.tanh(hs @ sw2[i] + sb2[i, 0])
        ht = jnp.maximum(xa @ tw1[i] + tb1[i, 0], 0.0)
        t = ht @ tw2[i] + tb2[i, 0]
        yb = (xb - t) * jnp.exp(-s)
        x = jnp.flip(jnp.concatenate([xa, yb], axis=1), axis=1)
        ldj = ldj - jnp.sum(s, axis=1)
    log_prob = -0.5 * jnp.sum(x * x, axis=1) - 0.5 * D * LOG_2PI
    return -jnp.mean(log_prob + ldj), x, ldj


if __name__ == "__main__":
    key = jax.random.PRNGKey(0)
    k_params, k_x, k_noise = jax.random.split(key, 3)

    params = init_params(k_params)
    slab, (p_fin, q_fin) = pack_params(params)
    x = jax.random.normal(k_x, (B, D), jnp.float32)
    # dequantization noise: (1 - U[0,1)) / 2 ; the add itself happens in-kernel
    noise = (1.0 - jax.random.uniform(k_noise, (B, D), jnp.float32)) / 2.0

    loss, x_f, ldj, xn = realnvp_forward(x, noise, slab, p_fin=p_fin, q_fin=q_fin)
    jax.block_until_ready(loss)

    ref_loss, ref_x, ref_ldj = realnvp_reference(xn, params)
    assert jnp.allclose(x_f, ref_x, atol=1e-4), "transformed x mismatch"
    assert jnp.allclose(ldj, ref_ldj, atol=1e-4), "ldj mismatch"
    assert jnp.allclose(loss, ref_loss, atol=1e-4), "loss mismatch"

    print("KERNEL_OK")
</pallas_src>

<mosaic_0001>
module attributes {stable_mosaic.version = 11 : i64} {
  func.func @_realnvp_fwd_kernel(%arg0: i32, %arg1: memref<8x64xf32, #tpu.memory_space<vmem>>, %arg2: memref<4x88x128xf32, #tpu.memory_space<vmem>>, %arg3: memref<8x128xf32, #tpu.memory_space<vmem>>) attributes {dimension_semantics = [#tpu.dimension_semantics<arbitrary>], iteration_bounds = array<i64: 1>, scalar_prefetch = 0 : i64, scratch_operands = 0 : i64, tpu.core_type = #tpu.core_type<tc>, window_params = [{pipeline_mode = #tpu.pipeline_mode<synchronous>, transform_indices = @transform_0, window_bounds = array<i64: 8, 64>}, {pipeline_mode = #tpu.pipeline_mode<synchronous>, transform_indices = @transform_1, window_bounds = array<i64: 4, 88, 128>}, {pipeline_mode = #tpu.pipeline_mode<synchronous>, transform_indices = @transform_2, window_bounds = array<i64: 8, 128>}]} {
    %c0 = arith.constant 0 : index
    %c0_0 = arith.constant 0 : index
    %0 = vector.load %arg1[%c0, %c0_0] : memref<8x64xf32, #tpu.memory_space<vmem>>, vector<8x64xf32>
    %1 = vector.extract_strided_slice %0 {offsets = [0, 0], sizes = [8, 32], strides = [1, 1]} : vector<8x64xf32> to vector<8x32xf32>
    %2 = vector.extract_strided_slice %0 {offsets = [0, 32], sizes = [8, 32], strides = [1, 1]} : vector<8x64xf32> to vector<8x32xf32>
    %3 = arith.addf %1, %2 : vector<8x32xf32>
    %4 = vector.extract_strided_slice %3 {offsets = [0, 0], sizes = [8, 16], strides = [1, 1]} : vector<8x32xf32> to vector<8x16xf32>
    %5 = vector.extract_strided_slice %3 {offsets = [0, 16], sizes = [8, 16], strides = [1, 1]} : vector<8x32xf32> to vector<8x16xf32>
    %6 = tpu.iota {dimensions = array<i32: 1>} : vector<8x64xi32>
    %c32_i32 = arith.constant 32 : i32
    %7 = vector.broadcast %c32_i32 : i32 to vector<8x64xi32>
    %8 = arith.cmpi slt, %6, %7 : vector<8x64xi32>
    %cst = arith.constant 0.000000e+00 : f32
    %9 = vector.broadcast %cst : f32 to vector<8x16xf32>
    %c0_i32 = arith.constant 0 : i32
    %10 = arith.index_cast %c0_i32 : i32 to index
    %c0_1 = arith.constant 0 : index
    %c0_2 = arith.constant 0 : index
    %11 = vector.load %arg2[%10, %c0_1, %c0_2] : memref<4x88x128xf32, #tpu.memory_space<vmem>>, vector<1x16x64xf32>
    %12 = vector.shape_cast %11 : vector<1x16x64xf32> to vector<16x64xf32>
    %13 = arith.index_cast %c0_i32 : i32 to index
    %c80 = arith.constant 80 : index
    %c0_3 = arith.constant 0 : index
    %14 = vector.load %arg2[%13, %c80, %c0_3] : memref<4x88x128xf32, #tpu.memory_space<vmem>>, vector<1x1x64xf32>
    %15 = vector.shape_cast %14 : vector<1x1x64xf32> to vector<1x64xf32>
    %cst_4 = arith.constant dense<0.000000e+00> : vector<8x64xf32>
    %16 = tpu.matmul %4, %12, %cst_4 {dimension_numbers = #tpu.dot_dimension_numbers<[1], [0], [0], [1], [0, 0, 1, 1], [], []>} : vector<8x16xf32>, vector<16x64xf32>, vector<8x64xf32> -> vector<8x64xf32>
    %17 = vector.broadcast %15 : vector<1x64xf32> to vector<8x64xf32>
    %18 = arith.addf %16, %17 : vector<8x64xf32>
    %19 = math.tanh %18 : vector<8x64xf32>
    %cst_5 = arith.constant 0.000000e+00 : f32
    %20 = vector.broadcast %cst_5 : f32 to vector<8x64xf32>
    %21 = arith.maximumf %18, %20 : vector<8x64xf32>
    %22 = arith.select %8, %19, %21 : vector<8x64xi1>, vector<8x64xf32>
    %23 = arith.index_cast %c0_i32 : i32 to index
    %c16 = arith.constant 16 : index
    %c0_6 = arith.constant 0 : index
    %24 = vector.load %arg2[%23, %c16, %c0_6] : memref<4x88x128xf32, #tpu.memory_space<vmem>>, vector<1x64x32xf32>
    %25 = vector.shape_cast %24 : vector<1x64x32xf32> to vector<64x32xf32>
    %26 = arith.index_cast %c0_i32 : i32 to index
    %c80_7 = arith.constant 80 : index
    %c64 = arith.constant 64 : index
    %27 = vector.load %arg2[%26, %c80_7, %c64] : memref<4x88x128xf32, #tpu.memory_space<vmem>>, vector<1x1x32xf32>
    %28 = vector.shape_cast %27 : vector<1x1x32xf32> to vector<1x32xf32>
    %cst_8 = arith.constant dense<0.000000e+00> : vector<8x32xf32>
    %29 = tpu.matmul %22, %25, %cst_8 {dimension_numbers = #tpu.dot_dimension_numbers<[1], [0], [0], [1], [0, 0, 1, 1], [], []>} : vector<8x64xf32>, vector<64x32xf32>, vector<8x32xf32> -> vector<8x32xf32>
    %30 = vector.broadcast %28 : vector<1x32xf32> to vector<8x32xf32>
    %31 = arith.addf %29, %30 : vector<8x32xf32>
    %32 = vector.extract_strided_slice %31 {offsets = [0, 0], sizes = [8, 16], strides = [1, 1]} : vector<8x32xf32> to vector<8x16xf32>
    %33 = math.tanh %32 : vector<8x16xf32>
    %34 = vector.extract_strided_slice %31 {offsets = [0, 16], sizes = [8, 16], strides = [1, 1]} : vector<8x32xf32> to vector<8x16xf32>
    %35 = arith.subf %5, %34 : vector<8x16xf32>
    %cst_9 = arith.constant 0.000000e+00 : f32
    %36 = vector.broadcast %cst_9 : f32 to vector<8x16xf32>
    %37 = arith.subf %36, %33 : vector<8x16xf32>
    %38 = math.exp %37 : vector<8x16xf32>
    %39 = arith.mulf %35, %38 : vector<8x16xf32>
    %40 = arith.addf %9, %33 : vector<8x16xf32>
    %c1_i32 = arith.constant 1 : i32
    %41 = arith.index_cast %c1_i32 : i32 to index
    %c0_10 = arith.constant 0 : index
    %c0_11 = arith.constant 0 : index
    %42 = vector.load %arg2[%41, %c0_10, %c0_11] : memref<4x88x128xf32, #tpu.memory_space<vmem>>, vector<1x16x64xf32>
    %43 = vector.shape_cast %42 : vector<1x16x64xf32> to vector<16x64xf32>
    %44 = arith.index_cast %c1_i32 : i32 to index
    %c80_12 = arith.constant 80 : index
    %c0_13 = arith.constant 0 : index
    %45 = vector.load %arg2[%44, %c80_12, %c0_13] : memref<4x88x128xf32, #tpu.memory_space<vmem>>, vector<1x1x64xf32>
    %46 = vector.shape_cast %45 : vector<1x1x64xf32> to vector<1x64xf32>
    %cst_14 = arith.constant dense<0.000000e+00> : vector<8x64xf32>
    %47 = tpu.matmul %39, %43, %cst_14 {dimension_numbers = #tpu.dot_dimension_numbers<[1], [0], [0], [1], [0, 0, 1, 1], [], []>} : vector<8x16xf32>, vector<16x64xf32>, vector<8x64xf32> -> vector<8x64xf32>
    %48 = vector.broadcast %46 : vector<1x64xf32> to vector<8x64xf32>
    %49 = arith.addf %47, %48 : vector<8x64xf32>
    %50 = math.tanh %49 : vector<8x64xf32>
    %cst_15 = arith.constant 0.000000e+00 : f32
    %51 = vector.broadcast %cst_15 : f32 to vector<8x64xf32>
    %52 = arith.maximumf %49, %51 : vector<8x64xf32>
    %53 = arith.select %8, %50, %52 : vector<8x64xi1>, vector<8x64xf32>
    %54 = arith.index_cast %c1_i32 : i32 to index
    %c16_16 = arith.constant 16 : index
    %c0_17 = arith.constant 0 : index
    %55 = vector.load %arg2[%54, %c16_16, %c0_17] : memref<4x88x128xf32, #tpu.memory_space<vmem>>, vector<1x64x32xf32>
    %56 = vector.shape_cast %55 : vector<1x64x32xf32> to vector<64x32xf32>
    %57 = arith.index_cast %c1_i32 : i32 to index
    %c80_18 = arith.constant 80 : index
    %c64_19 = arith.constant 64 : index
    %58 = vector.load %arg2[%57, %c80_18, %c64_19] : memref<4x88x128xf32, #tpu.memory_space<vmem>>, vector<1x1x32xf32>
    %59 = vector.shape_cast %58 : vector<1x1x32xf32> to vector<1x32xf32>
    %cst_20 = arith.constant dense<0.000000e+00> : vector<8x32xf32>
    %60 = tpu.matmul %53, %56, %cst_20 {dimension_numbers = #tpu.dot_dimension_numbers<[1], [0], [0], [1], [0, 0, 1, 1], [], []>} : vector<8x64xf32>, vector<64x32xf32>, vector<8x32xf32> -> vector<8x32xf32>
    %61 = vector.broadcast %59 : vector<1x32xf32> to vector<8x32xf32>
    %62 = arith.addf %60, %61 : vector<8x32xf32>
    %63 = vector.extract_strided_slice %62 {offsets = [0, 0], sizes = [8, 16], strides = [1, 1]} : vector<8x32xf32> to vector<8x16xf32>
    %64 = math.tanh %63 : vector<8x16xf32>
    %65 = vector.extract_strided_slice %62 {offsets = [0, 16], sizes = [8, 16], strides = [1, 1]} : vector<8x32xf32> to vector<8x16xf32>
    %66 = arith.subf %4, %65 : vector<8x16xf32>
    %cst_21 = arith.constant 0.000000e+00 : f32
    %67 = vector.broadcast %cst_21 : f32 to vector<8x16xf32>
    %68 = arith.subf %67, %64 : vector<8x16xf32>
    %69 = math.exp %68 : vector<8x16xf32>
    %70 = arith.mulf %66, %69 : vector<8x16xf32>
    %71 = arith.addf %40, %64 : vector<8x16xf32>
    %c2_i32 = arith.constant 2 : i32
    %72 = arith.index_cast %c2_i32 : i32 to index
    %c0_22 = arith.constant 0 : index
    %c0_23 = arith.constant 0 : index
    %73 = vector.load %arg2[%72, %c0_22, %c0_23] : memref<4x88x128xf32, #tpu.memory_space<vmem>>, vector<1x16x64xf32>
    %74 = vector.shape_cast %73 : vector<1x16x64xf32> to vector<16x64xf32>
    %75 = arith.index_cast %c2_i32 : i32 to index
    %c80_24 = arith.constant 80 : index
    %c0_25 = arith.constant 0 : index
    %76 = vector.load %arg2[%75, %c80_24, %c0_25] : memref<4x88x128xf32, #tpu.memory_space<vmem>>, vector<1x1x64xf32>
    %77 = vector.shape_cast %76 : vector<1x1x64xf32> to vector<1x64xf32>
    %cst_26 = arith.constant dense<0.000000e+00> : vector<8x64xf32>
    %78 = tpu.matmul %70, %74, %cst_26 {dimension_numbers = #tpu.dot_dimension_numbers<[1], [0], [0], [1], [0, 0, 1, 1], [], []>} : vector<8x16xf32>, vector<16x64xf32>, vector<8x64xf32> -> vector<8x64xf32>
    %79 = vector.broadcast %77 : vector<1x64xf32> to vector<8x64xf32>
    %80 = arith.addf %78, %79 : vector<8x64xf32>
    %81 = math.tanh %80 : vector<8x64xf32>
    %cst_27 = arith.constant 0.000000e+00 : f32
    %82 = vector.broadcast %cst_27 : f32 to vector<8x64xf32>
    %83 = arith.maximumf %80, %82 : vector<8x64xf32>
    %84 = arith.select %8, %81, %83 : vector<8x64xi1>, vector<8x64xf32>
    %85 = arith.index_cast %c2_i32 : i32 to index
    %c16_28 = arith.constant 16 : index
    %c0_29 = arith.constant 0 : index
    %86 = vector.load %arg2[%85, %c16_28, %c0_29] : memref<4x88x128xf32, #tpu.memory_space<vmem>>, vector<1x64x32xf32>
    %87 = vector.shape_cast %86 : vector<1x64x32xf32> to vector<64x32xf32>
    %88 = arith.index_cast %c2_i32 : i32 to index
    %c80_30 = arith.constant 80 : index
    %c64_31 = arith.constant 64 : index
    %89 = vector.load %arg2[%88, %c80_30, %c64_31] : memref<4x88x128xf32, #tpu.memory_space<vmem>>, vector<1x1x32xf32>
    %90 = vector.shape_cast %89 : vector<1x1x32xf32> to vector<1x32xf32>
    %cst_32 = arith.constant dense<0.000000e+00> : vector<8x32xf32>
    %91 = tpu.matmul %84, %87, %cst_32 {dimension_numbers = #tpu.dot_dimension_numbers<[1], [0], [0], [1], [0, 0, 1, 1], [], []>} : vector<8x64xf32>, vector<64x32xf32>, vector<8x32xf32> -> vector<8x32xf32>
    %92 = vector.broadcast %90 : vector<1x32xf32> to vector<8x32xf32>
    %93 = arith.addf %91, %92 : vector<8x32xf32>
    %94 = vector.extract_strided_slice %93 {offsets = [0, 0], sizes = [8, 16], strides = [1, 1]} : vector<8x32xf32> to vector<8x16xf32>
    %95 = math.tanh %94 : vector<8x16xf32>
    %96 = vector.extract_strided_slice %93 {offsets = [0, 16], sizes = [8, 16], strides = [1, 1]} : vector<8x32xf32> to vector<8x16xf32>
    %97 = arith.subf %39, %96 : vector<8x16xf32>
    %cst_33 = arith.constant 0.000000e+00 : f32
    %98 = vector.broadcast %cst_33 : f32 to vector<8x16xf32>
    %99 = arith.subf %98, %95 : vector<8x16xf32>
    %100 = math.exp %99 : vector<8x16xf32>
    %101 = arith.mulf %97, %100 : vector<8x16xf32>
    %102 = arith.addf %71, %95 : vector<8x16xf32>
    %c3_i32 = arith.constant 3 : i32
    %103 = arith.index_cast %c3_i32 : i32 to index
    %c0_34 = arith.constant 0 : index
    %c0_35 = arith.constant 0 : index
    %104 = vector.load %arg2[%103, %c0_34, %c0_35] : memref<4x88x128xf32, #tpu.memory_space<vmem>>, vector<1x16x64xf32>
    %105 = vector.shape_cast %104 : vector<1x16x64xf32> to vector<16x64xf32>
    %106 = arith.index_cast %c3_i32 : i32 to index
    %c80_36 = arith.constant 80 : index
    %c0_37 = arith.constant 0 : index
    %107 = vector.load %arg2[%106, %c80_36, %c0_37] : memref<4x88x128xf32, #tpu.memory_space<vmem>>, vector<1x1x64xf32>
    %108 = vector.shape_cast %107 : vector<1x1x64xf32> to vector<1x64xf32>
    %cst_38 = arith.constant dense<0.000000e+00> : vector<8x64xf32>
    %109 = tpu.matmul %101, %105, %cst_38 {dimension_numbers = #tpu.dot_dimension_numbers<[1], [0], [0], [1], [0, 0, 1, 1], [], []>} : vector<8x16xf32>, vector<16x64xf32>, vector<8x64xf32> -> vector<8x64xf32>
    %110 = vector.broadcast %108 : vector<1x64xf32> to vector<8x64xf32>
    %111 = arith.addf %109, %110 : vector<8x64xf32>
    %112 = math.tanh %111 : vector<8x64xf32>
    %cst_39 = arith.constant 0.000000e+00 : f32
    %113 = vector.broadcast %cst_39 : f32 to vector<8x64xf32>
    %114 = arith.maximumf %111, %113 : vector<8x64xf32>
    %115 = arith.select %8, %112, %114 : vector<8x64xi1>, vector<8x64xf32>
    %116 = arith.index_cast %c3_i32 : i32 to index
    %c16_40 = arith.constant 16 : index
    %c0_41 = arith.constant 0 : index
    %117 = vector.load %arg2[%116, %c16_40, %c0_41] : memref<4x88x128xf32, #tpu.memory_space<vmem>>, vector<1x64x32xf32>
    %118 = vector.shape_cast %117 : vector<1x64x32xf32> to vector<64x32xf32>
    %119 = arith.index_cast %c3_i32 : i32 to index
    %c80_42 = arith.constant 80 : index
    %c64_43 = arith.constant 64 : index
    %120 = vector.load %arg2[%119, %c80_42, %c64_43] : memref<4x88x128xf32, #tpu.memory_space<vmem>>, vector<1x1x32xf32>
    %121 = vector.shape_cast %120 : vector<1x1x32xf32> to vector<1x32xf32>
    %cst_44 = arith.constant dense<0.000000e+00> : vector<8x32xf32>
    %122 = tpu.matmul %115, %118, %cst_44 {dimension_numbers = #tpu.dot_dimension_numbers<[1], [0], [0], [1], [0, 0, 1, 1], [], []>} : vector<8x64xf32>, vector<64x32xf32>, vector<8x32xf32> -> vector<8x32xf32>
    %123 = vector.broadcast %121 : vector<1x32xf32> to vector<8x32xf32>
    %124 = arith.addf %122, %123 : vector<8x32xf32>
    %125 = vector.extract_strided_slice %124 {offsets = [0, 0], sizes = [8, 16], strides = [1, 1]} : vector<8x32xf32> to vector<8x16xf32>
    %126 = math.tanh %125 : vector<8x16xf32>
    %127 = vector.extract_strided_slice %124 {offsets = [0, 16], sizes = [8, 16], strides = [1, 1]} : vector<8x32xf32> to vector<8x16xf32>
    %128 = arith.subf %70, %127 : vector<8x16xf32>
    %cst_45 = arith.constant 0.000000e+00 : f32
    %129 = vector.broadcast %cst_45 : f32 to vector<8x16xf32>
    %130 = arith.subf %129, %126 : vector<8x16xf32>
    %131 = math.exp %130 : vector<8x16xf32>
    %132 = arith.mulf %128, %131 : vector<8x16xf32>
    %133 = arith.addf %102, %126 : vector<8x16xf32>
    %c4_i32 = arith.constant 4 : i32
    %cst_46 = arith.constant dense<0.000000e+00> : vector<8xf32>
    %134 = vector.multi_reduction <add>, %133, %cst_46 [1] : vector<8x16xf32> to vector<8xf32>
    %135 = vector.shape_cast %134 : vector<8xf32> to vector<8x1xf32>
    %cst_47 = arith.constant 0.000000e+00 : f32
    %136 = vector.broadcast %cst_47 : f32 to vector<8x1xf32>
    %137 = arith.subf %136, %135 : vector<8x1xf32>
    %138 = tpu.concatenate %132, %101 in 1 : vector<8x16xf32>, vector<8x16xf32> -> vector<8x32xf32>
    %139 = arith.mulf %138, %138 : vector<8x32xf32>
    %cst_48 = arith.constant dense<0.000000e+00> : vector<8xf32>
    %140 = vector.multi_reduction <add>, %139, %cst_48 [1] : vector<8x32xf32> to vector<8xf32>
    %141 = vector.shape_cast %140 : vector<8xf32> to vector<8x1xf32>
    %cst_49 = arith.constant 5.000000e-01 : f32
    %142 = vector.broadcast %cst_49 : f32 to vector<8x1xf32>
    %143 = arith.mulf %142, %141 : vector<8x1xf32>
    %cst_50 = arith.constant 29.4060326 : f32
    %144 = vector.broadcast %cst_50 : f32 to vector<8x1xf32>
    %145 = arith.addf %143, %144 : vector<8x1xf32>
    %146 = arith.subf %145, %137 : vector<8x1xf32>
    %cst_51 = arith.constant 0.000000e+00 : f32
    %147 = vector.broadcast %cst_51 : f32 to vector<8x1xf32>
    %148 = vector.shape_cast %146 : vector<8x1xf32> to vector<1x8x1xf32>
    %cst_52 = arith.constant dense<0.000000e+00> : vector<1xf32>
    %149 = vector.multi_reduction <add>, %148, %cst_52 [1, 2] : vector<1x8x1xf32> to vector<1xf32>
    %150 = vector.shape_cast %149 : vector<1xf32> to vector<1x1x1xf32>
    %151 = vector.extract %150[0, 0, 0] : f32 from vector<1x1x1xf32>
    %cst_53 = arith.constant 8.000000e+00 : f32
    %152 = arith.divf %151, %cst_53 : f32
    %153 = vector.broadcast %152 : f32 to vector<8x1xf32>
    %154 = arith.addf %147, %153 : vector<8x1xf32>
    %cst_54 = arith.constant 0.000000e+00 : f32
    %155 = vector.broadcast %cst_54 : f32 to vector<8x61xf32>
    %156 = tpu.concatenate %138, %3, %137, %146, %154, %155 in 1 : vector<8x32xf32>, vector<8x32xf32>, vector<8x1xf32>, vector<8x1xf32>, vector<8x1xf32>, vector<8x61xf32> -> vector<8x128xf32>
    %c0_55 = arith.constant 0 : index
    %c0_56 = arith.constant 0 : index
    %157 = vector.load %arg3[%c0_55, %c0_56] : memref<8x128xf32, #tpu.memory_space<vmem>>, vector<8x128xf32>
    tpu.vector_store %arg3[%c0_55, %c0_56], %156 {strides = array<i32>} : memref<8x128xf32, #tpu.memory_space<vmem>>, vector<8x128xf32>,
    return
  }
  func.func @transform_0(%arg0: i32) -> (i32, i32) {
    %c0_i32 = arith.constant 0 : i32
    %c0_i32_0 = arith.constant 0 : i32
    %c0_i32_1 = arith.constant 0 : i32
    return %c0_i32, %c0_i32_0 : i32, i32
  }
  func.func @transform_1(%arg0: i32) -> (i32, i32, i32) {
    %c0_i32 = arith.constant 0 : i32
    %c0_i32_0 = arith.constant 0 : i32
    %c0_i32_1 = arith.constant 0 : i32
    %c0_i32_2 = arith.constant 0 : i32
    return %c0_i32, %c0_i32_0, %c0_i32_1 : i32, i32, i32
  }
  func.func @transform_2(%arg0: i32) -> (i32, i32) {
    %c0_i32 = arith.constant 0 : i32
    %c0_i32_0 = arith.constant 0 : i32
    %c0_i32_1 = arith.constant 0 : i32
    return %c0_i32, %c0_i32_0 : i32, i32
  }
}

</mosaic_0001>

<llo_original>
// kernel: realnvp_forward.1
$region0: #{realnvp_forward.1}
  #allocation0 [shape = 'u32[]', space=smem, size = 0x4, offset = 0x4, fixed_abs, tag = 'smem constant byte address 0x4 - core index']
  #allocation1 [shape = 'u32[72,128]{1,0:T(1,128)}', space=vmem, size = 0x9000, scoped, tag = 'internal scratch']
  %s0 = inlined_call_operand.vmem [shape: f32[8,64], index: 0, kind: input, shape index: {}]
  %s1 = inlined_call_operand.hbm [shape: f32[4,88,128], index: 1, kind: input, shape index: {}]
  %s2 = inlined_call_operand.vmem [shape: f32[8,128], index: 2, kind: output, shape index: {}]
  %s3 = sld [smem:[#allocation0]]
  $region22: #{realnvp_forward.1} parent=0
    _
  %s5 = ssub.s32 1, %s3
  %s6 = scalar_select 0, %s5, %s3
  $region1: #{realnvp_forward.1} parent=0
    #allocation2 [shape = 'u8[180224]{0}', space=vmem, size = 0x2c000, scoped, tag = 'input window, operand 1, single buffered']
    #allocation3 [shape = 's32[1]{0}', space=sflag, size = 0x4, scoped, tag = 'scoped memory for realnvp_forward.1']
    %7 = vsyncpa [#allocation3], 0
    // Predicated region
    $region2: #{realnvp_forward.1} parent=1 // pred_check
      _
    $region3: #{realnvp_forward.1} parent=1 // pred_check_branch
      %9 = sbr.rel (0) target = $region5
    $region4: #{realnvp_forward.1} parent=1 // pred_region
      _
    $region5: #{realnvp_forward.1} parent=1 // pred_fallthru
      _
    // Predicated region
    $region6: #{realnvp_forward.1} parent=1 // pred_check
      _
    $region7: #{realnvp_forward.1} parent=1 // pred_check_branch
      %11 = sbr.rel (0) target = $region9
    $region8: #{realnvp_forward.1} parent=1 // pred_region
      %13 = vsyncadd [#allocation3], 0
      %s14 = sshll.u32 %s1, 4
      %s15 = int_to_ptr.hbm [resolvable:$true] %s14
      %s16 = sshll.u32 [#allocation2], 4
      %s17 = int_to_ptr.vmem [resolvable:$true] %s16
      %22 = dma.hbm_to_vmem [thread:$0]  %s15, 5632, %s17, [#allocation3], 128, 128, 8
    $region9: #{realnvp_forward.1} parent=1 // pred_fallthru
      _
    // Predicated region
    $region10: #{realnvp_forward.1} parent=1 // pred_check
      _
    $region11: #{realnvp_forward.1} parent=1 // pred_check_branch
      %24 = sbr.rel (0) target = $region13
    $region12: #{realnvp_forward.1} parent=1 // pred_region
      %26 = dma.done [#allocation3], 5632
    $region13: #{realnvp_forward.1} parent=1 // pred_fallthru
      _
    %v27 = vld [vmem:[%s0] sm:$0xff]
    %29 = vrot.lane.b32.xlu0 %v27, 96
    %v30 = vpop.permute.xlu0 %29
    %v32 = vadd.f32 %v27, %v30
    %v33 = vlaneseq
    %v34 = vand.u32 %v33, 127
    %vm35 = vcmp.lt.s32.totalorder %v34, 32
    %v36 = vld [vmem:[#allocation2] sm:$0xff]
    %v37 = vld [vmem:[#allocation2 + $0x8] sm:$0xff]
    %v38 = vld [vmem:[#allocation2 + $0x50] sm:$0x1]
    %v39 = vperm.slane %v38, 0
    %vm40 = vcmask 130048
    %v42 = vsel %vm40, %v32, 0
    %44 = vmatpush.msra.mxu0 0.0
    %45 = vmatpush.msra.mxu0 0.0
    %46 = vmatpush.msra.mxu0 0.0
    %47 = vmatpush.msra.mxu0 0.0
    %48 = vmatpush.msra.mxu0 0.0
    %49 = vmatpush.msra.mxu0 0.0
    %50 = vmatpush.msra.mxu0 0.0
    %51 = vmatpush.msra.mxu0 0.0
    %52 = vmatpush.msra.mxu0 0.0
    %53 = vmatpush.msra.mxu0 0.0
    %54 = vmatpush.msra.mxu0 0.0
    %55 = vmatpush.msra.mxu0 0.0
    %56 = vmatpush.msra.mxu0 0.0
    %57 = vmatpush.msra.mxu0 0.0
    %58 = vmatpush.msra.mxu0 %v37
    %59 = vmatpush.msra.mxu0 %v36
    %60 = vmatmul.f32.gmra.mxu0 %v42
    %v61 = vpop.f32.mrf.mxu0
    %v62 = vadd.f32 %v39, %v61
    %63 = vdwg.mxu0
    %v64 = vtanh.pop %v62
    %v65 = vmax.f32 %v62, 0.0
    %v66 = vsel %vm35, %v64, %v65
    %v67 = vld [vmem:[#allocation2 + $0x10] sm:$0xff]
    %v68 = vld [vmem:[#allocation2 + $0x18] sm:$0xff]
    %v69 = vld [vmem:[#allocation2 + $0x20] sm:$0xff]
    %v70 = vld [vmem:[#allocation2 + $0x28] sm:$0xff]
    %v71 = vld [vmem:[#allocation2 + $0x30] sm:$0xff]
    %v72 = vld [vmem:[#allocation2 + $0x38] sm:$0xff]
    %v73 = vld [vmem:[#allocation2 + $0x40] sm:$0xff]
    %v74 = vld [vmem:[#allocation2 + $0x48] sm:$0xff]
    %76 = vrot.lane.b32.xlu0 %v39, 64
    %v77 = vpop.permute.xlu0 %76
    %vm79 = vcmask 523264
    %v81 = vsel %vm79, %v66, 0
    %83 = vmatpush.msra.mxu0 0.0
    %84 = vmatpush.msra.mxu0 0.0
    %85 = vmatpush.msra.mxu0 0.0
    %86 = vmatpush.msra.mxu0 0.0
    %87 = vmatpush.msra.mxu0 0.0
    %88 = vmatpush.msra.mxu0 0.0
    %89 = vmatpush.msra.mxu0 0.0
    %90 = vmatpush.msra.mxu0 0.0
    %91 = vmatpush.msra.mxu0 %v74
    %92 = vmatpush.msra.mxu0 %v73
    %93 = vmatpush.msra.mxu0 %v72
    %94 = vmatpush.msra.mxu0 %v71
    %95 = vmatpush.msra.mxu0 %v70
    %96 = vmatpush.msra.mxu0 %v69
    %97 = vmatpush.msra.mxu0 %v68
    %98 = vmatpush.msra.mxu0 %v67
    %99 = vmatmul.f32.gmra.mxu0 %v81
    %v100 = vpop.f32.mrf.mxu0
    %v101 = vadd.f32 %v77, %v100
    %102 = vdwg.mxu0
    %v103 = vtanh.pop %v101
    %v104 = vsub.f32 %v32, %v101
    %v105 = vsub.f32 0.0, %v103
    %v106 = vmul.f32 %v105, 1.442695
    %v107 = vpow.pop %v106
    %109 = vrot.lane.b32.xlu0 %v107, 16
    %v110 = vpop.permute.xlu0 %109
    %v112 = vmul.f32 %v104, %v110
    %v113 = vadd.f32 %v103, 0.0
    %s114 = scalar_lea.vmem [#allocation2], 88
    %v115 = vld [vmem:[%s114] sm:$0xff]
    %v116 = vld [vmem:[%s114 + $0x8] sm:$0xff]
    %v117 = vld [vmem:[%s114 + $0x50] sm:$0x1]
    %v118 = vperm.slane %v117, 0
    %120 = vrot.lane.b32.xlu0 %v112, 112
    %v121 = vpop.permute.xlu0 %120
    %v122 = vsel %vm40, %v121, 0
    %124 = vmatpush.msra.mxu0 0.0
    %125 = vmatpush.msra.mxu0 0.0
    %126 = vmatpush.msra.mxu0 0.0
    %127 = vmatpush.msra.mxu0 0.0
    %128 = vmatpush.msra.mxu0 0.0
    %129 = vmatpush.msra.mxu0 0.0
    %130 = vmatpush.msra.mxu0 0.0
    %131 = vmatpush.msra.mxu0 0.0
    %132 = vmatpush.msra.mxu0 0.0
    %133 = vmatpush.msra.mxu0 0.0
    %134 = vmatpush.msra.mxu0 0.0
    %135 = vmatpush.msra.mxu0 0.0
    %136 = vmatpush.msra.mxu0 0.0
    %137 = vmatpush.msra.mxu0 0.0
    %138 = vmatpush.msra.mxu0 %v116
    %139 = vmatpush.msra.mxu0 %v115
    %140 = vmatmul.f32.gmra.mxu0 %v122
    %v141 = vpop.f32.mrf.mxu0
    %v142 = vadd.f32 %v118, %v141
    %143 = vdwg.mxu0
    %v144 = vtanh.pop %v142
    %v145 = vmax.f32 %v142, 0.0
    %v146 = vsel %vm35, %v144, %v145
    %v147 = vld [vmem:[%s114 + $0x10] sm:$0xff]
    %v148 = vld [vmem:[%s114 + $0x18] sm:$0xff]
    %v149 = vld [vmem:[%s114 + $0x20] sm:$0xff]
    %v150 = vld [vmem:[%s114 + $0x28] sm:$0xff]
    %v151 = vld [vmem:[%s114 + $0x30] sm:$0xff]
    %v152 = vld [vmem:[%s114 + $0x38] sm:$0xff]
    %v153 = vld [vmem:[%s114 + $0x40] sm:$0xff]
    %v154 = vld [vmem:[%s114 + $0x48] sm:$0xff]
    %156 = vrot.lane.b32.xlu0 %v118, 64
    %v157 = vpop.permute.xlu0 %156
    %v160 = vsel %vm79, %v146, 0
    %162 = vmatpush.msra.mxu0 0.0
    %163 = vmatpush.msra.mxu0 0.0
    %164 = vmatpush.msra.mxu0 0.0
    %165 = vmatpush.msra.mxu0 0.0
    %166 = vmatpush.msra.mxu0 0.0
    %167 = vmatpush.msra.mxu0 0.0
    %168 = vmatpush.msra.mxu0 0.0
    %169 = vmatpush.msra.mxu0 0.0
    %170 = vmatpush.msra.mxu0 %v154
    %171 = vmatpush.msra.mxu0 %v153
    %172 = vmatpush.msra.mxu0 %v152
    %173 = vmatpush.msra.mxu0 %v151
    %174 = vmatpush.msra.mxu0 %v150
    %175 = vmatpush.msra.mxu0 %v149
    %176 = vmatpush.msra.mxu0 %v148
    %177 = vmatpush.msra.mxu0 %v147
    %178 = vmatmul.f32.gmra.mxu0 %v160
    %v179 = vpop.f32.mrf.mxu0
    %v180 = vadd.f32 %v157, %v179
    %181 = vdwg.mxu0
    %v182 = vtanh.pop %v180
    %184 = vrot.lane.b32.xlu0 %v180, 112
    %v185 = vpop.permute.xlu0 %184
    %v187 = vsub.f32 %v32, %v185
    %v188 = vsub.f32 0.0, %v182
    %v189 = vmul.f32 %v188, 1.442695
    %v190 = vpow.pop %v189
    %v191 = vmul.f32 %v187, %v190
    %v192 = vadd.f32 %v113, %v182
    %s193 = scalar_lea.vmem [#allocation2], 176
    %v194 = vld [vmem:[%s193] sm:$0xff]
    %v195 = vld [vmem:[%s193 + $0x8] sm:$0xff]
    %v196 = vld [vmem:[%s193 + $0x50] sm:$0x1]
    %v197 = vperm.slane %v196, 0
    %v199 = vsel %vm40, %v191, 0
    %201 = vmatpush.msra.mxu0 0.0
    %202 = vmatpush.msra.mxu0 0.0
    %203 = vmatpush.msra.mxu0 0.0
    %204 = vmatpush.msra.mxu0 0.0
    %205 = vmatpush.msra.mxu0 0.0
    %206 = vmatpush.msra.mxu0 0.0
    %207 = vmatpush.msra.mxu0 0.0
    %208 = vmatpush.msra.mxu0 0.0
    %209 = vmatpush.msra.mxu0 0.0
    %210 = vmatpush.msra.mxu0 0.0
    %211 = vmatpush.msra.mxu0 0.0
    %212 = vmatpush.msra.mxu0 0.0
    %213 = vmatpush.msra.mxu0 0.0
    %214 = vmatpush.msra.mxu0 0.0
    %215 = vmatpush.msra.mxu0 %v195
    %216 = vmatpush.msra.mxu0 %v194
    %217 = vmatmul.f32.gmra.mxu0 %v199
    %v218 = vpop.f32.mrf.mxu0
    %v219 = vadd.f32 %v197, %v218
    %220 = vdwg.mxu0
    %v221 = vtanh.pop %v219
    %v222 = vmax.f32 %v219, 0.0
    %v223 = vsel %vm35, %v221, %v222
    %v224 = vld [vmem:[%s193 + $0x10] sm:$0xff]
    %v225 = vld [vmem:[%s193 + $0x18] sm:$0xff]
    %v226 = vld [vmem:[%s193 + $0x20] sm:$0xff]
    %v227 = vld [vmem:[%s193 + $0x28] sm:$0xff]
    %v228 = vld [vmem:[%s193 + $0x30] sm:$0xff]
    %v229 = vld [vmem:[%s193 + $0x38] sm:$0xff]
    %v230 = vld [vmem:[%s193 + $0x40] sm:$0xff]
    %v231 = vld [vmem:[%s193 + $0x48] sm:$0xff]
    %233 = vrot.lane.b32.xlu0 %v197, 64
    %v234 = vpop.permute.xlu0 %233
    %v237 = vsel %vm79, %v223, 0
    %239 = vmatpush.msra.mxu0 0.0
    %240 = vmatpush.msra.mxu0 0.0
    %241 = vmatpush.msra.mxu0 0.0
    %242 = vmatpush.msra.mxu0 0.0
    %243 = vmatpush.msra.mxu0 0.0
    %244 = vmatpush.msra.mxu0 0.0
    %245 = vmatpush.msra.mxu0 0.0
    %246 = vmatpush.msra.mxu0 0.0
    %247 = vmatpush.msra.mxu0 %v231
    %248 = vmatpush.msra.mxu0 %v230
    %249 = vmatpush.msra.mxu0 %v229
    %250 = vmatpush.msra.mxu0 %v228
    %251 = vmatpush.msra.mxu0 %v227
    %252 = vmatpush.msra.mxu0 %v226
    %253 = vmatpush.msra.mxu0 %v225
    %254 = vmatpush.msra.mxu0 %v224
    %255 = vmatmul.f32.gmra.mxu0 %v237
    %v256 = vpop.f32.mrf.mxu0
    %v257 = vadd.f32 %v234, %v256
    %258 = vdwg.mxu0
    %v259 = vtanh.pop %v257
    %v260 = vsub.f32 %v112, %v257
    %v261 = vsub.f32 0.0, %v259
    %v262 = vmul.f32 %v261, 1.442695
    %v263 = vpow.pop %v262
    %265 = vrot.lane.b32.xlu0 %v263, 16
    %v266 = vpop.permute.xlu0 %265
    %v268 = vmul.f32 %v260, %v266
    %v269 = vadd.f32 %v192, %v259
    %s270 = scalar_lea.vmem [#allocation2], 264
    %v271 = vld [vmem:[%s270] sm:$0xff]
    %v272 = vld [vmem:[%s270 + $0x8] sm:$0xff]
    %v273 = vld [vmem:[%s270 + $0x50] sm:$0x1]
    %v274 = vperm.slane %v273, 0
    %276 = vrot.lane.b32.xlu0 %v268, 112
    %v277 = vpop.permute.xlu0 %276
    %v278 = vsel %vm40, %v277, 0
    %280 = vmatpush.msra.mxu0 0.0
    %281 = vmatpush.msra.mxu0 0.0
    %282 = vmatpush.msra.mxu0 0.0
    %283 = vmatpush.msra.mxu0 0.0
    %284 = vmatpush.msra.mxu0 0.0
    %285 = vmatpush.msra.mxu0 0.0
    %286 = vmatpush.msra.mxu0 0.0
    %287 = vmatpush.msra.mxu0 0.0
    %288 = vmatpush.msra.mxu0 0.0
    %289 = vmatpush.msra.mxu0 0.0
    %290 = vmatpush.msra.mxu0 0.0
    %291 = vmatpush.msra.mxu0 0.0
    %292 = vmatpush.msra.mxu0 0.0
    %293 = vmatpush.msra.mxu0 0.0
    %294 = vmatpush.msra.mxu0 %v272
    %295 = vmatpush.msra.mxu0 %v271
    %296 = vmatmul.f32.gmra.mxu0 %v278
    %v297 = vpop.f32.mrf.mxu0
    %v298 = vadd.f32 %v274, %v297
    %299 = vdwg.mxu0
    %v300 = vtanh.pop %v298
    %v301 = vmax.f32 %v298, 0.0
    %v302 = vsel %vm35, %v300, %v301
    %v303 = vld [vmem:[%s270 + $0x10] sm:$0xff]
    %v304 = vld [vmem:[%s270 + $0x18] sm:$0xff]
    %v305 = vld [vmem:[%s270 + $0x20] sm:$0xff]
    %v306 = vld [vmem:[%s270 + $0x28] sm:$0xff]
    %v307 = vld [vmem:[%s270 + $0x30] sm:$0xff]
    %v308 = vld [vmem:[%s270 + $0x38] sm:$0xff]
    %v309 = vld [vmem:[%s270 + $0x40] sm:$0xff]
    %v310 = vld [vmem:[%s270 + $0x48] sm:$0xff]
    %312 = vrot.lane.b32.xlu0 %v274, 64
    %v313 = vpop.permute.xlu0 %312
    %v316 = vsel %vm79, %v302, 0
    %318 = vmatpush.msra.mxu0 0.0
    %319 = vmatpush.msra.mxu0 0.0
    %320 = vmatpush.msra.mxu0 0.0
    %321 = vmatpush.msra.mxu0 0.0
    %322 = vmatpush.msra.mxu0 0.0
    %323 = vmatpush.msra.mxu0 0.0
    %324 = vmatpush.msra.mxu0 0.0
    %325 = vmatpush.msra.mxu0 0.0
    %326 = vmatpush.msra.mxu0 %v310
    %327 = vmatpush.msra.mxu0 %v309
    %328 = vmatpush.msra.mxu0 %v308
    %329 = vmatpush.msra.mxu0 %v307
    %330 = vmatpush.msra.mxu0 %v306
    %331 = vmatpush.msra.mxu0 %v305
    %332 = vmatpush.msra.mxu0 %v304
    %333 = vmatpush.msra.mxu0 %v303
    %334 = vmatmul.f32.gmra.mxu0 %v316
    %v335 = vpop.f32.mrf.mxu0
    %v336 = vadd.f32 %v313, %v335
    %337 = vdwg.mxu0
    %v338 = vtanh.pop %v336
    %340 = vrot.lane.b32.xlu0 %v336, 112
    %v341 = vpop.permute.xlu0 %340
    %v343 = vsub.f32 %v191, %v341
    %v344 = vsub.f32 0.0, %v338
    %v345 = vmul.f32 %v344, 1.442695
    %v346 = vpow.pop %v345
    %v347 = vmul.f32 %v343, %v346
    %v348 = vadd.f32 %v269, %v338
    %v349 = vsel %vm40, %v348, 0.0
    %350 = vadd.xlane.f32.xlu0 %v349
    %v351 = vpop.xlane.xlu0 %350
    %v352 = vsub.f32 0.0, %v351
    %v353 = vsel %vm40, %v347, %v268
    %v354 = vmul.f32 %v353, %v353
    %vm355 = vcmask 261120
    %v356 = vsel %vm355, %v354, 0.0
    %357 = vadd.xlane.f32.xlu0 %v356
    %v358 = vpop.xlane.xlu0 %357
    %v359 = vmul.f32 %v358, 0.5
    %v360 = vadd.f32 %v359, 29.406033
    %v361 = vsub.f32 %v360, %v352
    %vm362 = vcmask 7168
    %v363 = vsel %vm362, %v361, 0.0
    %364 = vadd.xlane.f32.xlu0 %v363
    %v365 = vpop.xlane.xlu0 %364
    %v366 = vrot.slane %v365, 4
    %v367 = vadd.f32 %v365, %v366
    %v368 = vrot.slane %v367, 2
    %v369 = vadd.f32 %v367, %v368
    %v370 = vrot.slane %v369, 1
    %v371 = vadd.f32 %v369, %v370
    %s372 = vtos %v371
    %v373 = vrcp.pop 8.0
    %v374 = vmul.f32 8.0, %v373
    %v375 = vsub.f32 1.0, %v374
    %v376 = vmul.f32 %v373, %v375
    %v377 = vadd.f32 %v373, %v376
    %vm378 = vweird.f32 %v373
    %v379 = vsel %vm378, %v373, %v377
    %s380 = vtos %v379
    %s381 = smul.f32 %s372, %s380
    %v382 = vstv %s381
    %v383 = vadd.f32 %v382, 0.0
    %384 = vrot.lane.b32.xlu0 %v32, 32
    %v385 = vpop.permute.xlu0 %384
    %v387 = vsel %vm355, %v353, %v385
    %v388 = vsel %vm79, %v387, %v352
    %vm389 = vcmask 531456
    %v390 = vsel %vm389, %v388, %v361
    %vm391 = vcmask 539648
    %v392 = vsel %vm391, %v390, %v383
    %vm393 = vcmask 547840
    %v394 = vsel %vm393, %v392, 0.0
    %395 = vst [vmem:[%s2] sm:$0xff] %v394
    // Predicated region
    $region14: #{realnvp_forward.1} parent=1 // pred_check
      _
    $region15: #{realnvp_forward.1} parent=1 // pred_check_branch
      %397 = sbr.rel (0) target = $region17
    $region16: #{realnvp_forward.1} parent=1 // pred_region
      _
    $region17: #{realnvp_forward.1} parent=1 // pred_fallthru
      _
    // Predicated region
    $region18: #{realnvp_forward.1} parent=1 // pred_check
      _
    $region19: #{realnvp_forward.1} parent=1 // pred_check_branch
      %399 = sbr.rel (0) target = $region21
    $region20: #{realnvp_forward.1} parent=1 // pred_region
      _
    $region21: #{realnvp_forward.1} parent=1 // pred_fallthru
      _
    %400 = vsyncpa [#allocation3], 1

</llo_original>
